<compile_context>
chip_gen: v7x
topology: tpu7x:2x2x1
jax: 0.10.0
libtpu: 0.0.40
codegen_flags: <defaults>
</compile_context>

<pallas_src>
import functools

import jax
import jax.numpy as jnp
import numpy as np
from jax.experimental import pallas as pl
from jax.experimental.pallas import tpu as pltpu


# ---------------------------------------------------------------------------
# VMEM budgeting / batch-tile selection
# ---------------------------------------------------------------------------

def _vmem_capacity_bytes():
    """Physical VMEM per core; conservative v7x-safe fallback (v5e/v6e have 128 MiB)."""
    try:
        return int(pltpu.get_tpu_info().vmem_capacity_bytes)
    except Exception:
        return 64 << 20


def _per_sample_vmem_bytes(L, L_out, c0, hidden_couts, d_pad, itemsize=4):
    """Per-batch-sample VMEM bytes at the widest point of the kernel.

    Every (M, C) f32 slab with C <= 128 is lane-padded to 128 lanes, so it costs
    M * 128 * itemsize regardless of C.  Counts live slabs per conv layer
    (h, h_prev, h_next, im2col cols, acc, pooled), the fc layer, plus the
    double-buffered input/output blocks managed by the pipeline.
    """
    lane = lambda c: (-(-max(int(c), 1) // 128)) * 128
    worst = 0
    cin, rows = c0, L
    for cout in hidden_couts:
        live = rows * (3 * lane(cin) + lane(3 * cin) + lane(cout)) \
            + (rows // 2) * lane(cout)
        worst = max(worst, live)
        cin, rows = cout, rows // 2
    worst = max(worst, rows * (lane(cin) + lane(d_pad)))          # fc matmul
    io = 2 * L * lane(c0) + 2 * L_out * lane(d_pad)               # double-buffered blocks
    return (worst + io) * itemsize


def _pick_b_tile(B, L, L_out, per_sample_bytes, budget_bytes, max_rows=8192):
    """Largest batch tile that fits the VMEM budget, satisfies the Mosaic (8,128)
    sublane rule, keeps <= max_rows rows per grid step, and (when possible) leaves
    >= 2 grid steps so the pipeline / v7x megacore have work."""
    cands = [d for d in range(1, B + 1) if B % d == 0]

    def legal(d):  # full-extent blocks are always allowed; otherwise need sublane mult of 8
        return d == B or ((d * L) % 8 == 0 and (d * L_out) % 8 == 0)

    ok = [d for d in cands
          if legal(d) and d * per_sample_bytes <= budget_bytes and d * L <= max_rows]
    if not ok:
        ok = [min(d for d in cands if legal(d))]      # tiny-batch / huge-L corner case

    multi = [d for d in ok if B // d >= 2]            # >=2 grid steps: overlap + megacore
    deep = [d for d in multi if d * L_out >= 256]     # amortize MXU fill/drain (v6e/v7x)
    if deep:
        return max(deep)
    if multi:
        return max(multi)
    return max(ok)


# ---------------------------------------------------------------------------
# Kernel
# ---------------------------------------------------------------------------

def _conv_relu_pool(h, w_ref, b_ref, seg_len):
    """h: (M, Cin) activations, M = b_tile * seg_len (batch folded into rows).
    w_ref: (3*Cin, Cout) im2col-stacked weights (rows [0:Cin] multiply x[l-1],
    [Cin:2Cin] multiply x[l], [2Cin:3Cin] multiply x[l+1]).  b_ref: (1, Cout).
    Returns MaxPool1d(2)(ReLU(Conv1d(k=3, pad=1)(h))) -> (M // 2, Cout) float32."""
    M, _ = h.shape
    Cout = w_ref.shape[-1]

    # Row position inside its batch segment (conv edge masking instead of padding).
    pos = jax.lax.broadcasted_iota(jnp.int32, (M, 1), 0)
    if (seg_len & (seg_len - 1)) == 0:                  # power of two: cheap strength-reduce
        pos = pos & (seg_len - 1)
    else:
        pos = pos % seg_len
    # h_prev[i] = h[i-1]; zero on the first row of each segment (zero padding).
    h_prev = jnp.where(pos == 0, 0.0, pltpu.roll(h, 1, 0))
    # h_next[i] = h[i+1]; zero on the last row of each segment.
    h_next = jnp.where(pos == seg_len - 1, 0.0, pltpu.roll(h, M - 1, 0))

    # im2col: one MXU dot per layer instead of 3 per-tap dots.
    cols = jnp.concatenate([h_prev, h, h_next], axis=1)          # (M, 3*Cin)
    acc = jnp.dot(cols, w_ref[...], preferred_element_type=jnp.float32)
    acc = acc + b_ref[...]                                       # bias once, after the dot
    acc = jnp.maximum(acc, 0.0)                                  # ReLU

    # MaxPool1d(2): elementwise max of adjacent rows (VALU max, no axis reduce).
    # NOTE: kept as a reshape pair-select; the roll+stride-2 alternative still needs a
    # sublane compaction, so no clear win without a lowering audit.
    r = acc.reshape(M // 2, 2, Cout)
    return jnp.maximum(r[:, 0, :], r[:, 1, :])


def _mycnn_kernel(n_layers, seg_len, x_ref, *refs):
    # refs = (w1, b1, ..., wN, bN, fc_w, fc_b, o_ref)
    o_ref = refs[-1]
    wf_ref, bf_ref = refs[-3], refs[-2]

    h = x_ref[...]                     # (b_tile*L, C0) — native dtype feeds the first dot
    cur = seg_len
    for i in range(n_layers):
        h = _conv_relu_pool(h, refs[2 * i], refs[2 * i + 1], cur)  # f32 out, no downcast
        cur //= 2

    out = jnp.dot(h, wf_ref[...], preferred_element_type=jnp.float32) + bf_ref[...]
    o_ref[...] = out.astype(o_ref.dtype)            # lane-dense (b_tile*L_out, D_pad) store


# ---------------------------------------------------------------------------
# Wrapper
# ---------------------------------------------------------------------------

def mycnn_forward(x, conv_ws, conv_bs, fc_w, fc_b, *, b_tile=None):
    """x: (B, L, C0); conv_ws[i]: (3, Cin_i, Cout_i); conv_bs[i]: (Cout_i,) or (1, Cout_i);
    fc_w: (C_last, Dout); fc_b: (Dout,) or (1, Dout).
    Returns (B, L // 2**n_layers, Dout)."""
    B, L, C0 = x.shape
    n_layers = len(conv_ws)
    # Odd intermediate lengths (PyTorch MaxPool1d would floor) are not supported.
    assert L % (2 ** n_layers) == 0, "L must be divisible by 2**len(hidden_sizes)"
    L_out = L // (2 ** n_layers)
    Dout = fc_w.shape[1]
    D_pad = pl.cdiv(Dout, 128) * 128                 # lane-dense output width
    # TODO(synk): for very large B*L_out with tiny Dout, pack several sequence positions
    # per 128-lane output row (or switch to a masked Dout-wide store) to cut the ~128/Dout
    # HBM writeback inflation; not needed at these shapes.

    hidden_couts = [int(w.shape[-1]) for w in conv_ws]
    per_sample = _per_sample_vmem_bytes(L, L_out, C0, hidden_couts, D_pad)
    capacity = _vmem_capacity_bytes()
    budget = int(capacity * 0.6)                     # conservative; v7x has only 64 MiB

    if b_tile is None:
        b_tile = _pick_b_tile(B, L, L_out, per_sample, budget)
    assert B % b_tile == 0
    if b_tile < B:
        # Mosaic (8,128) rule on the non-full-extent sublane dims.
        assert (b_tile * L) % 8 == 0 and (b_tile * L_out) % 8 == 0, \
            "b_tile*L and b_tile*L_out must be multiples of 8 when b_tile < B"

    # Fold batch into the row (matmul M) dimension.
    x2 = x.reshape(B * L, C0)
    conv_bs = [jnp.reshape(bv, (1, -1)) for bv in conv_bs]
    # Host-side im2col weight stacking: (3, Cin, Cout) -> (3*Cin, Cout), tap-major.
    conv_ws_s = [w.reshape(w.shape[0] * w.shape[1], w.shape[2]) for w in conv_ws]
    fc_w_pad = jnp.zeros((fc_w.shape[0], D_pad), fc_w.dtype).at[:, :Dout].set(fc_w)
    fc_b_pad = jnp.zeros((1, D_pad), fc_w.dtype).at[:, :Dout].set(jnp.reshape(fc_b, (1, -1)))

    params = []
    in_specs = [pl.BlockSpec((b_tile * L, C0), lambda b: (b, 0))]
    for w, bv in zip(conv_ws_s, conv_bs):
        params += [w, bv]
        in_specs += [pl.BlockSpec(w.shape, lambda b: (0, 0)),
                     pl.BlockSpec(bv.shape, lambda b: (0, 0))]
    params += [fc_w_pad, fc_b_pad]
    in_specs += [pl.BlockSpec(fc_w_pad.shape, lambda b: (0, 0)),
                 pl.BlockSpec(fc_b_pad.shape, lambda b: (0, 0))]

    # Scoped VMEM limit sized to the modeled working set (+25% headroom), never below
    # the 32 MiB default and never above ~90% of physical.
    working_set = b_tile * per_sample
    vmem_limit = int(min(max(working_set * 5 // 4 + (2 << 20), 32 << 20),
                         int(capacity * 0.9)))

    kernel = functools.partial(_mycnn_kernel, n_layers, L)
    out = pl.pallas_call(
        kernel,
        out_shape=jax.ShapeDtypeStruct((B * L_out, D_pad), x.dtype),
        grid=(B // b_tile,),
        in_specs=in_specs,
        out_specs=pl.BlockSpec((b_tile * L_out, D_pad), lambda b: (b, 0)),
        compiler_params=pltpu.CompilerParams(
            dimension_semantics=("parallel",),       # batch-tile axis shardable on v7x
            vmem_limit_bytes=vmem_limit),
    )(x2, *params)
    return out[:, :Dout].reshape(B, L_out, Dout)


# ---------------------------------------------------------------------------
# Pure-JAX reference (identical semantics) + self-test
# ---------------------------------------------------------------------------

def mycnn_reference(x, conv_ws, conv_bs, fc_w, fc_b):
    h = x
    for w, bvec in zip(conv_ws, conv_bs):
        B, L, Cin = h.shape
        Cout = w.shape[-1]
        hp = jnp.pad(h, ((0, 0), (1, 1), (0, 0)))
        y = jnp.zeros((B, L, Cout), jnp.float32) + jnp.reshape(bvec, (1, 1, -1))
        for k in range(3):
            y = y + jnp.einsum('blc,cd->bld', hp[:, k:k + L, :], w[k])
        y = jnp.maximum(y, 0.0)
        h = jnp.max(y.reshape(B, L // 2, 2, Cout), axis=2)
    return jnp.einsum('blc,cd->bld', h, fc_w) + jnp.reshape(fc_b, (1, 1, -1))


if __name__ == "__main__":
    key = jax.random.PRNGKey(0)

    # Small shapes implied by the module: x is (batch, seq, input_dim).
    B, L = 2, 16
    input_dim, hidden_sizes, output_dim = 4, (8, 16), 6

    keys = jax.random.split(key, 2 * len(hidden_sizes) + 3)
    x = jax.random.normal(keys[0], (B, L, input_dim), dtype=jnp.float32)

    # Deterministic parameter init (PyTorch-style uniform(+-1/sqrt(fan_in))).
    conv_ws, conv_bs = [], []
    cin = input_dim
    ki = 1
    for h in hidden_sizes:
        bound = 1.0 / np.sqrt(cin * 3)
        w_pt = jax.random.uniform(keys[ki], (h, cin, 3),
                                  minval=-bound, maxval=bound)      # (Cout, Cin, K)
        b_pt = jax.random.uniform(keys[ki + 1], (h,),
                                  minval=-bound, maxval=bound)
        conv_ws.append(jnp.transpose(w_pt, (2, 1, 0)).astype(jnp.float32))  # (K, Cin, Cout)
        conv_bs.append(b_pt.reshape(1, h).astype(jnp.float32))
        cin = h
        ki += 2
    bound = 1.0 / np.sqrt(cin)
    fc_w_pt = jax.random.uniform(keys[ki], (output_dim, cin),
                                 minval=-bound, maxval=bound)        # (out, in)
    fc_b_pt = jax.random.uniform(keys[ki + 1], (output_dim,),
                                 minval=-bound, maxval=bound)
    fc_w = fc_w_pt.T.astype(jnp.float32)                             # (in, out)
    fc_b = fc_b_pt.reshape(1, output_dim).astype(jnp.float32)

    out = mycnn_forward(x, conv_ws, conv_bs, fc_w, fc_b)
    out = jax.block_until_ready(out)

    ref = mycnn_reference(x, conv_ws, conv_bs, fc_w, fc_b)
    np.testing.assert_allclose(np.asarray(out), np.asarray(ref),
                               rtol=1e-5, atol=1e-5)
    assert out.shape == (B, L // (2 ** len(hidden_sizes)), output_dim)
    print("KERNEL_OK")
</pallas_src>

<mosaic_0001>
module attributes {stable_mosaic.version = 11 : i64} {
  func.func @_mycnn_kernel(%arg0: i32, %arg1: memref<32x4xf32, #tpu.memory_space<vmem>>, %arg2: memref<12x8xf32, #tpu.memory_space<vmem>>, %arg3: memref<1x8xf32, #tpu.memory_space<vmem>>, %arg4: memref<24x16xf32, #tpu.memory_space<vmem>>, %arg5: memref<1x16xf32, #tpu.memory_space<vmem>>, %arg6: memref<16x128xf32, #tpu.memory_space<vmem>>, %arg7: memref<1x128xf32, #tpu.memory_space<vmem>>, %arg8: memref<8x128xf32, #tpu.memory_space<vmem>>) attributes {dimension_semantics = [#tpu.dimension_semantics<parallel>], iteration_bounds = array<i64: 1>, scalar_prefetch = 0 : i64, scratch_operands = 0 : i64, tpu.core_type = #tpu.core_type<tc>, window_params = [{transform_indices = @transform_0, window_bounds = array<i64: 32, 4>}, {pipeline_mode = #tpu.pipeline_mode<synchronous>, transform_indices = @transform_1, window_bounds = array<i64: 12, 8>}, {pipeline_mode = #tpu.pipeline_mode<synchronous>, transform_indices = @transform_2, window_bounds = array<i64: 1, 8>}, {pipeline_mode = #tpu.pipeline_mode<synchronous>, transform_indices = @transform_3, window_bounds = array<i64: 24, 16>}, {pipeline_mode = #tpu.pipeline_mode<synchronous>, transform_indices = @transform_4, window_bounds = array<i64: 1, 16>}, {pipeline_mode = #tpu.pipeline_mode<synchronous>, transform_indices = @transform_5, window_bounds = array<i64: 16, 128>}, {pipeline_mode = #tpu.pipeline_mode<synchronous>, transform_indices = @transform_6, window_bounds = array<i64: 1, 128>}, {transform_indices = @transform_7, window_bounds = array<i64: 8, 128>}]} {
    %c0 = arith.constant 0 : index
    %c0_0 = arith.constant 0 : index
    %0 = vector.load %arg1[%c0, %c0_0] : memref<32x4xf32, #tpu.memory_space<vmem>>, vector<32x4xf32>
    %1 = tpu.iota {dimensions = array<i32: 0>} : vector<32x1xi32>
    %c15_i32 = arith.constant 15 : i32
    %2 = vector.broadcast %c15_i32 : i32 to vector<32x1xi32>
    %3 = arith.andi %1, %2 : vector<32x1xi32>
    %c0_i32 = arith.constant 0 : i32
    %4 = vector.broadcast %c0_i32 : i32 to vector<32x1xi32>
    %5 = arith.cmpi eq, %3, %4 : vector<32x1xi32>
    %c1_i32 = arith.constant 1 : i32
    %6 = tpu.dynamic_rotate %0 by %c1_i32 dim 0 : vector<32x4xf32>, i32 -> vector<32x4xf32>
    %cst = arith.constant 0.000000e+00 : f32
    %7 = vector.shape_cast %5 : vector<32x1xi1> to vector<32x1xi1>
    %8 = vector.broadcast %7 : vector<32x1xi1> to vector<32x4xi1>
    %9 = vector.broadcast %cst : f32 to vector<32x4xf32>
    %10 = arith.select %8, %9, %6 : vector<32x4xi1>, vector<32x4xf32>
    %c15_i32_1 = arith.constant 15 : i32
    %11 = vector.broadcast %c15_i32_1 : i32 to vector<32x1xi32>
    %12 = arith.cmpi eq, %3, %11 : vector<32x1xi32>
    %c31_i32 = arith.constant 31 : i32
    %13 = tpu.dynamic_rotate %0 by %c31_i32 dim 0 : vector<32x4xf32>, i32 -> vector<32x4xf32>
    %cst_2 = arith.constant 0.000000e+00 : f32
    %14 = vector.shape_cast %12 : vector<32x1xi1> to vector<32x1xi1>
    %15 = vector.broadcast %14 : vector<32x1xi1> to vector<32x4xi1>
    %16 = vector.broadcast %cst_2 : f32 to vector<32x4xf32>
    %17 = arith.select %15, %16, %13 : vector<32x4xi1>, vector<32x4xf32>
    %18 = tpu.concatenate %10, %0, %17 in 1 : vector<32x4xf32>, vector<32x4xf32>, vector<32x4xf32> -> vector<32x12xf32>
    %c0_3 = arith.constant 0 : index
    %c0_4 = arith.constant 0 : index
    %19 = vector.load %arg2[%c0_3, %c0_4] : memref<12x8xf32, #tpu.memory_space<vmem>>, vector<12x8xf32>
    %cst_5 = arith.constant dense<0.000000e+00> : vector<32x8xf32>
    %20 = tpu.matmul %18, %19, %cst_5 {dimension_numbers = #tpu.dot_dimension_numbers<[1], [0], [0], [1], [0, 0, 1, 1], [], []>} : vector<32x12xf32>, vector<12x8xf32>, vector<32x8xf32> -> vector<32x8xf32>
    %c0_6 = arith.constant 0 : index
    %c0_7 = arith.constant 0 : index
    %21 = vector.load %arg3[%c0_6, %c0_7] : memref<1x8xf32, #tpu.memory_space<vmem>>, vector<1x8xf32>
    %22 = vector.broadcast %21 : vector<1x8xf32> to vector<32x8xf32>
    %23 = arith.addf %20, %22 : vector<32x8xf32>
    %cst_8 = arith.constant 0.000000e+00 : f32
    %24 = vector.broadcast %cst_8 : f32 to vector<32x8xf32>
    %25 = arith.maximumf %23, %24 : vector<32x8xf32>
    %26 = vector.shape_cast %25 : vector<32x8xf32> to vector<16x2x8xf32>
    %27 = vector.extract_strided_slice %26 {offsets = [0, 0, 0], sizes = [16, 1, 8], strides = [1, 1, 1]} : vector<16x2x8xf32> to vector<16x1x8xf32>
    %28 = vector.shape_cast %27 : vector<16x1x8xf32> to vector<16x8xf32>
    %29 = vector.extract_strided_slice %26 {offsets = [0, 1, 0], sizes = [16, 1, 8], strides = [1, 1, 1]} : vector<16x2x8xf32> to vector<16x1x8xf32>
    %30 = vector.shape_cast %29 : vector<16x1x8xf32> to vector<16x8xf32>
    %31 = arith.maximumf %28, %30 : vector<16x8xf32>
    %32 = tpu.iota {dimensions = array<i32: 0>} : vector<16x1xi32>
    %c7_i32 = arith.constant 7 : i32
    %33 = vector.broadcast %c7_i32 : i32 to vector<16x1xi32>
    %34 = arith.andi %32, %33 : vector<16x1xi32>
    %c0_i32_9 = arith.constant 0 : i32
    %35 = vector.broadcast %c0_i32_9 : i32 to vector<16x1xi32>
    %36 = arith.cmpi eq, %34, %35 : vector<16x1xi32>
    %c1_i32_10 = arith.constant 1 : i32
    %37 = tpu.dynamic_rotate %31 by %c1_i32_10 dim 0 : vector<16x8xf32>, i32 -> vector<16x8xf32>
    %cst_11 = arith.constant 0.000000e+00 : f32
    %38 = vector.shape_cast %36 : vector<16x1xi1> to vector<16x1xi1>
    %39 = vector.broadcast %38 : vector<16x1xi1> to vector<16x8xi1>
    %40 = vector.broadcast %cst_11 : f32 to vector<16x8xf32>
    %41 = arith.select %39, %40, %37 : vector<16x8xi1>, vector<16x8xf32>
    %c7_i32_12 = arith.constant 7 : i32
    %42 = vector.broadcast %c7_i32_12 : i32 to vector<16x1xi32>
    %43 = arith.cmpi eq, %34, %42 : vector<16x1xi32>
    %c15_i32_13 = arith.constant 15 : i32
    %44 = tpu.dynamic_rotate %31 by %c15_i32_13 dim 0 : vector<16x8xf32>, i32 -> vector<16x8xf32>
    %cst_14 = arith.constant 0.000000e+00 : f32
    %45 = vector.shape_cast %43 : vector<16x1xi1> to vector<16x1xi1>
    %46 = vector.broadcast %45 : vector<16x1xi1> to vector<16x8xi1>
    %47 = vector.broadcast %cst_14 : f32 to vector<16x8xf32>
    %48 = arith.select %46, %47, %44 : vector<16x8xi1>, vector<16x8xf32>
    %49 = tpu.concatenate %41, %31, %48 in 1 : vector<16x8xf32>, vector<16x8xf32>, vector<16x8xf32> -> vector<16x24xf32>
    %c0_15 = arith.constant 0 : index
    %c0_16 = arith.constant 0 : index
    %50 = vector.load %arg4[%c0_15, %c0_16] : memref<24x16xf32, #tpu.memory_space<vmem>>, vector<24x16xf32>
    %cst_17 = arith.constant dense<0.000000e+00> : vector<16x16xf32>
    %51 = tpu.matmul %49, %50, %cst_17 {dimension_numbers = #tpu.dot_dimension_numbers<[1], [0], [0], [1], [0, 0, 1, 1], [], []>} : vector<16x24xf32>, vector<24x16xf32>, vector<16x16xf32> -> vector<16x16xf32>
    %c0_18 = arith.constant 0 : index
    %c0_19 = arith.constant 0 : index
    %52 = vector.load %arg5[%c0_18, %c0_19] : memref<1x16xf32, #tpu.memory_space<vmem>>, vector<1x16xf32>
    %53 = vector.broadcast %52 : vector<1x16xf32> to vector<16x16xf32>
    %54 = arith.addf %51, %53 : vector<16x16xf32>
    %cst_20 = arith.constant 0.000000e+00 : f32
    %55 = vector.broadcast %cst_20 : f32 to vector<16x16xf32>
    %56 = arith.maximumf %54, %55 : vector<16x16xf32>
    %57 = vector.shape_cast %56 : vector<16x16xf32> to vector<8x2x16xf32>
    %58 = vector.extract_strided_slice %57 {offsets = [0, 0, 0], sizes = [8, 1, 16], strides = [1, 1, 1]} : vector<8x2x16xf32> to vector<8x1x16xf32>
    %59 = vector.shape_cast %58 : vector<8x1x16xf32> to vector<8x16xf32>
    %60 = vector.extract_strided_slice %57 {offsets = [0, 1, 0], sizes = [8, 1, 16], strides = [1, 1, 1]} : vector<8x2x16xf32> to vector<8x1x16xf32>
    %61 = vector.shape_cast %60 : vector<8x1x16xf32> to vector<8x16xf32>
    %62 = arith.maximumf %59, %61 : vector<8x16xf32>
    %c0_21 = arith.constant 0 : index
    %c0_22 = arith.constant 0 : index
    %63 = vector.load %arg6[%c0_21, %c0_22] : memref<16x128xf32, #tpu.memory_space<vmem>>, vector<16x128xf32>
    %cst_23 = arith.constant dense<0.000000e+00> : vector<8x128xf32>
    %64 = tpu.matmul %62, %63, %cst_23 {dimension_numbers = #tpu.dot_dimension_numbers<[1], [0], [0], [1], [0, 0, 1, 1], [], []>} : vector<8x16xf32>, vector<16x128xf32>, vector<8x128xf32> -> vector<8x128xf32>
    %c0_24 = arith.constant 0 : index
    %c0_25 = arith.constant 0 : index
    %65 = vector.load %arg7[%c0_24, %c0_25] : memref<1x128xf32, #tpu.memory_space<vmem>>, vector<1x128xf32>
    %66 = vector.broadcast %65 : vector<1x128xf32> to vector<8x128xf32>
    %67 = arith.addf %64, %66 : vector<8x128xf32>
    %c0_26 = arith.constant 0 : index
    %c0_27 = arith.constant 0 : index
    %68 = vector.load %arg8[%c0_26, %c0_27] : memref<8x128xf32, #tpu.memory_space<vmem>>, vector<8x128xf32>
    tpu.vector_store %arg8[%c0_26, %c0_27], %67 {strides = array<i32>} : memref<8x128xf32, #tpu.memory_space<vmem>>, vector<8x128xf32>,
    return
  }
  func.func @transform_0(%arg0: i32) -> (i32, i32) {
    %c0_i32 = arith.constant 0 : i32
    %c0_i32_0 = arith.constant 0 : i32
    return %arg0, %c0_i32 : i32, i32
  }
  func.func @transform_1(%arg0: i32) -> (i32, i32) {
    %c0_i32 = arith.constant 0 : i32
    %c0_i32_0 = arith.constant 0 : i32
    %c0_i32_1 = arith.constant 0 : i32
    return %c0_i32, %c0_i32_0 : i32, i32
  }
  func.func @transform_2(%arg0: i32) -> (i32, i32) {
    %c0_i32 = arith.constant 0 : i32
    %c0_i32_0 = arith.constant 0 : i32
    %c0_i32_1 = arith.constant 0 : i32
    return %c0_i32, %c0_i32_0 : i32, i32
  }
  func.func @transform_3(%arg0: i32) -> (i32, i32) {
    %c0_i32 = arith.constant 0 : i32
    %c0_i32_0 = arith.constant 0 : i32
    %c0_i32_1 = arith.constant 0 : i32
    return %c0_i32, %c0_i32_0 : i32, i32
  }
  func.func @transform_4(%arg0: i32) -> (i32, i32) {
    %c0_i32 = arith.constant 0 : i32
    %c0_i32_0 = arith.constant 0 : i32
    %c0_i32_1 = arith.constant 0 : i32
    return %c0_i32, %c0_i32_0 : i32, i32
  }
  func.func @transform_5(%arg0: i32) -> (i32, i32) {
    %c0_i32 = arith.constant 0 : i32
    %c0_i32_0 = arith.constant 0 : i32
    %c0_i32_1 = arith.constant 0 : i32
    return %c0_i32, %c0_i32_0 : i32, i32
  }
  func.func @transform_6(%arg0: i32) -> (i32, i32) {
    %c0_i32 = arith.constant 0 : i32
    %c0_i32_0 = arith.constant 0 : i32
    %c0_i32_1 = arith.constant 0 : i32
    return %c0_i32, %c0_i32_0 : i32, i32
  }
  func.func @transform_7(%arg0: i32) -> (i32, i32) {
    %c0_i32 = arith.constant 0 : i32
    %c0_i32_0 = arith.constant 0 : i32
    return %arg0, %c0_i32 : i32, i32
  }
}

</mosaic_0001>

<llo_original>
// kernel: tpu_custom_call.1
$region0: #{tpu_custom_call.1}
  #allocation0 [shape = 'u32[]', space=smem, size = 0x4, offset = 0x4, fixed_abs, tag = 'smem constant byte address 0x4 - core index']
  #allocation1 [shape = 'u32[144,128]{1,0:T(1,128)}', space=vmem, size = 0x12000, scoped, tag = 'internal scratch']
  %s0 = inlined_call_operand.vmem [shape: f32[32,4], index: 0, kind: input, shape index: {}]
  %s1 = inlined_call_operand.vmem [shape: f32[12,8], index: 1, kind: input, shape index: {}]
  %s2 = inlined_call_operand.vmem [shape: f32[1,8], index: 2, kind: input, shape index: {}]
  %s3 = inlined_call_operand.vmem [shape: f32[24,16], index: 3, kind: input, shape index: {}]
  %s4 = inlined_call_operand.vmem [shape: f32[1,16], index: 4, kind: input, shape index: {}]
  %s5 = inlined_call_operand.vmem [shape: f32[16,128], index: 5, kind: input, shape index: {}]
  %s6 = inlined_call_operand.vmem [shape: f32[1,128], index: 6, kind: input, shape index: {}]
  %s7 = inlined_call_operand.hbm [shape: f32[8,128], index: 7, kind: output, shape index: {}]
  %s8 = sld [smem:[#allocation0]]
  $region38: #{tpu_custom_call.1} parent=0
    _
  %s10 = ssub.s32 1, %s8
  %s11 = scalar_select 0, %s10, %s8
  $region1: #{tpu_custom_call.1} parent=0
    #allocation2 [shape = 'u8[4096]{0}', space=vmem, size = 0x1000, scoped, tag = 'output window, operand 0, single buffered']
    #allocation3 [shape = 's32[1]{0}', space=sflag, size = 0x4, scoped, tag = 'scoped memory for tpu_custom_call.1']
    %12 = vsyncpa [#allocation3], 0
    // Predicated region
    $region2: #{tpu_custom_call.1} parent=1 // pred_check
      _
    $region3: #{tpu_custom_call.1} parent=1 // pred_check_branch
      %14 = sbr.rel (0) target = $region5
    $region4: #{tpu_custom_call.1} parent=1 // pred_region
      _
    $region5: #{tpu_custom_call.1} parent=1 // pred_fallthru
      _
    // Predicated region
    $region6: #{tpu_custom_call.1} parent=1 // pred_check
      _
    $region7: #{tpu_custom_call.1} parent=1 // pred_check_branch
      %16 = sbr.rel (0) target = $region9
    $region8: #{tpu_custom_call.1} parent=1 // pred_region
      _
    $region9: #{tpu_custom_call.1} parent=1 // pred_fallthru
      _
    // Predicated region
    $region10: #{tpu_custom_call.1} parent=1 // pred_check
      _
    $region11: #{tpu_custom_call.1} parent=1 // pred_check_branch
      %18 = sbr.rel (0) target = $region13
    $region12: #{tpu_custom_call.1} parent=1 // pred_region
      _
    $region13: #{tpu_custom_call.1} parent=1 // pred_fallthru
      _
    // Predicated region
    $region14: #{tpu_custom_call.1} parent=1 // pred_check
      _
    $region15: #{tpu_custom_call.1} parent=1 // pred_check_branch
      %20 = sbr.rel (0) target = $region17
    $region16: #{tpu_custom_call.1} parent=1 // pred_region
      _
    $region17: #{tpu_custom_call.1} parent=1 // pred_fallthru
      _
    // Predicated region
    $region18: #{tpu_custom_call.1} parent=1 // pred_check
      _
    $region19: #{tpu_custom_call.1} parent=1 // pred_check_branch
      %22 = sbr.rel (0) target = $region21
    $region20: #{tpu_custom_call.1} parent=1 // pred_region
      _
    $region21: #{tpu_custom_call.1} parent=1 // pred_fallthru
      _
    // Predicated region
    $region22: #{tpu_custom_call.1} parent=1 // pred_check
      _
    $region23: #{tpu_custom_call.1} parent=1 // pred_check_branch
      %24 = sbr.rel (0) target = $region25
    $region24: #{tpu_custom_call.1} parent=1 // pred_region
      _
    $region25: #{tpu_custom_call.1} parent=1 // pred_fallthru
      _
    // Predicated region
    $region26: #{tpu_custom_call.1} parent=1 // pred_check
      _
    $region27: #{tpu_custom_call.1} parent=1 // pred_check_branch
      %26 = sbr.rel (0) target = $region29
    $region28: #{tpu_custom_call.1} parent=1 // pred_region
      _
    $region29: #{tpu_custom_call.1} parent=1 // pred_fallthru
      _
    %v27 = vld [vmem:[%s0] sm:$0xff]
    %v28 = vld [vmem:[%s0 + $0x8] sm:$0xff]
    %v29 = vld [vmem:[%s0 + $0x10] sm:$0xff]
    %v30 = vld [vmem:[%s0 + $0x18] sm:$0xff]
    %v31 = vlaneseq
    %v32 = vshrl.u32 %v31, 7
    %v33 = vadd.s32 %v32, 8
    %v34 = vadd.s32 %v32, 16
    %v35 = vadd.s32 %v32, 24
    %v36 = vand.u32 %v32, 15
    %v37 = vand.u32 %v33, 15
    %v38 = vand.u32 %v34, 15
    %v39 = vand.u32 %v35, 15
    %vm40 = vcmp.eq.s32.totalorder %v36, 0
    %vm41 = vcmp.eq.s32.totalorder %v37, 0
    %vm42 = vcmp.eq.s32.totalorder %v38, 0
    %vm43 = vcmp.eq.s32.totalorder %v39, 0
    %v44 = vrot.slane %v27, 7
    %v45 = vrot.slane %v28, 7
    %v46 = vrot.slane %v29, 7
    %v47 = vrot.slane %v30, 7
    %vm48 = vcmp.lt.s32.totalorder %v32, 1
    %v49 = vsel %vm48, %v46, %v47
    %v50 = vsel %vm48, %v45, %v46
    %v51 = vsel %vm48, %v44, %v45
    %v52 = vsel %vm48, %v47, %v44
    %v53 = vsel %vm40, 1, 0
    %v54 = vsel %vm41, 1, 0
    %v55 = vsel %vm42, 1, 0
    %v56 = vsel %vm43, 1, 0
    %vm57 = vcmp.eq.s32.totalorder %v53, 1
    %vm58 = vcmp.eq.s32.totalorder %v54, 1
    %vm59 = vcmp.eq.s32.totalorder %v55, 1
    %vm60 = vcmp.eq.s32.totalorder %v56, 1
    %v61 = vsel %vm57, 0.0, %v52
    %v62 = vsel %vm58, 0.0, %v51
    %v63 = vsel %vm59, 0.0, %v50
    %v64 = vsel %vm60, 0.0, %v49
    %vm65 = vcmp.eq.s32.totalorder %v36, 15
    %vm66 = vcmp.eq.s32.totalorder %v37, 15
    %vm67 = vcmp.eq.s32.totalorder %v38, 15
    %vm68 = vcmp.eq.s32.totalorder %v39, 15
    %v69 = vrot.slane %v27, 1
    %v70 = vrot.slane %v28, 1
    %v71 = vrot.slane %v29, 1
    %v72 = vrot.slane %v30, 1
    %vm73 = vcmp.lt.s32.totalorder %v32, 7
    %v74 = vsel %vm73, %v71, %v72
    %v75 = vsel %vm73, %v70, %v71
    %v76 = vsel %vm73, %v69, %v70
    %v77 = vsel %vm73, %v72, %v69
    %v78 = vsel %vm65, 1, 0
    %v79 = vsel %vm66, 1, 0
    %v80 = vsel %vm67, 1, 0
    %v81 = vsel %vm68, 1, 0
    %vm82 = vcmp.eq.s32.totalorder %v78, 1
    %vm83 = vcmp.eq.s32.totalorder %v79, 1
    %vm84 = vcmp.eq.s32.totalorder %v80, 1
    %vm85 = vcmp.eq.s32.totalorder %v81, 1
    %v86 = vsel %vm82, 0.0, %v76
    %v87 = vsel %vm83, 0.0, %v75
    %v88 = vsel %vm84, 0.0, %v74
    %v89 = vsel %vm85, 0.0, %v77
    %94 = vrot.lane.b32.xlu0 %v27, 4
    %v95 = vpop.permute.xlu0 %94
    %96 = vrot.lane.b32.xlu0 %v28, 4
    %v97 = vpop.permute.xlu0 %96
    %98 = vrot.lane.b32.xlu0 %v29, 4
    %v99 = vpop.permute.xlu0 %98
    %100 = vrot.lane.b32.xlu0 %v30, 4
    %v101 = vpop.permute.xlu0 %100
    %110 = vrot.lane.b32.xlu0 %v86, 8
    %v111 = vpop.permute.xlu0 %110
    %112 = vrot.lane.b32.xlu0 %v87, 8
    %v113 = vpop.permute.xlu0 %112
    %114 = vrot.lane.b32.xlu0 %v88, 8
    %v115 = vpop.permute.xlu0 %114
    %116 = vrot.lane.b32.xlu0 %v89, 8
    %v117 = vpop.permute.xlu0 %116
    %vm122 = vcmask 31744
    %v123 = vsel %vm122, %v61, %v95
    %v124 = vsel %vm122, %v62, %v97
    %v125 = vsel %vm122, %v63, %v99
    %v126 = vsel %vm122, %v64, %v101
    %vm127 = vcmask 64512
    %v128 = vsel %vm127, %v123, %v111
    %v129 = vsel %vm127, %v124, %v113
    %v130 = vsel %vm127, %v125, %v115
    %v131 = vsel %vm127, %v126, %v117
    %v132 = vld [vmem:[%s1] sm:$0xff]
    %v133 = vld [vmem:[%s1 + $0x8] sm:$0xf]
    %v134 = vld [vmem:[%s2] sm:$0x1]
    %v136 = vlaneseq
    %v137 = vshrl.u32 %v136, 7
    %v138 = vsub.s32 0, %v137
    %v139 = vrot.slane %v134, %v138
    %vm141 = vcmask 97280
    %v143 = vsel %vm141, %v128, 0
    %v146 = vsel %vm141, %v129, 0
    %v149 = vsel %vm141, %v130, 0
    %v152 = vsel %vm141, %v131, 0
    %vm154 = vcmask 1043456
    %v156 = vsel %vm154, %v133, 0
    %158 = vmatprep.subr.mxu0 0.0
    %159 = vmatpush1.msra.mxu0 %v132
    %160 = vmatprep.subr.mxu0 0.0
    %161 = vmatpush1.msra.mxu0 %v156
    %162 = vmatprep.subr.mxu0 0.0
    %163 = vmatpush1.msra.mxu0 0.0
    %164 = vmatprep.subr.mxu0 0.0
    %165 = vmatpush1.msra.mxu0 0.0
    %166 = vmatprep.subr.mxu0 0.0
    %167 = vmatpush1.msra.mxu0 0.0
    %168 = vmatprep.subr.mxu0 0.0
    %169 = vmatpush1.msra.mxu0 0.0
    %170 = vmatprep.subr.mxu0 0.0
    %171 = vmatpush1.msra.mxu0 0.0
    %172 = vmatprep.subr.mxu0 0.0
    %173 = vmatpush1.msra.mxu0 0.0
    %174 = vmatprep.subr.mxu0 0.0
    %175 = vmatpush1.msra.mxu0 0.0
    %176 = vmatprep.subr.mxu0 0.0
    %177 = vmatpush1.msra.mxu0 0.0
    %178 = vmatprep.subr.mxu0 0.0
    %179 = vmatpush1.msra.mxu0 0.0
    %180 = vmatprep.subr.mxu0 0.0
    %181 = vmatpush1.msra.mxu0 0.0
    %182 = vmatprep.subr.mxu0 0.0
    %183 = vmatpush1.msra.mxu0 0.0
    %184 = vmatprep.subr.mxu0 0.0
    %185 = vmatpush1.msra.mxu0 0.0
    %186 = vmatprep.subr.mxu0 0.0
    %187 = vmatpush1.msra.mxu0 0.0
    %188 = vmatprep.subr.mxu0 0.0
    %189 = vmatpush1.msra.mxu0 0.0
    %190 = vmatprep.subr.mxu0 0.0
    %191 = vmatpush1.msra.mxu0 0.0
    %192 = vmatprep.subr.mxu0 0.0
    %193 = vmatpush1.msra.mxu0 0.0
    %194 = vmatprep.subr.mxu0 0.0
    %195 = vmatpush1.msra.mxu0 0.0
    %196 = vmatprep.subr.mxu0 0.0
    %197 = vmatpush1.msra.mxu0 0.0
    %198 = vmatprep.subr.mxu0 0.0
    %199 = vmatpush1.msra.mxu0 0.0
    %200 = vmatprep.subr.mxu0 0.0
    %201 = vmatpush1.msra.mxu0 0.0
    %202 = vmatprep.subr.mxu0 0.0
    %203 = vmatpush1.msra.mxu0 0.0
    %204 = vmatprep.subr.mxu0 0.0
    %205 = vmatpush1.msra.mxu0 0.0
    %206 = vmatprep.subr.mxu0 0.0
    %207 = vmatpush1.msra.mxu0 0.0
    %208 = vmatprep.subr.mxu0 0.0
    %209 = vmatpush1.msra.mxu0 0.0
    %210 = vmatprep.subr.mxu0 0.0
    %211 = vmatpush1.msra.mxu0 0.0
    %212 = vmatprep.subr.mxu0 0.0
    %213 = vmatpush1.msra.mxu0 0.0
    %214 = vmatprep.subr.mxu0 0.0
    %215 = vmatpush1.msra.mxu0 0.0
    %216 = vmatprep.subr.mxu0 0.0
    %217 = vmatpush1.msra.mxu0 0.0
    %218 = vmatprep.subr.mxu0 0.0
    %219 = vmatpush1.msra.mxu0 0.0
    %220 = vmatprep.subr.mxu0 0.0
    %221 = vmatpush1.msra.mxu0 0.0
    %222 = vmatprep.mubr.f32.mxu0 0.0
    %223 = vmatmul.mubr.f32.gmra.mrb[0].mxu0 %v143
    %v224 = vpop.f32.mrb[0].mxu0
    %v225 = vadd.f32 %v139, %v224
    %v226 = vpop.f32.mrb[0].mxu0
    %227 = vmatprep.mubr.f32.mxu0 0.0
    %228 = vmatmul.mubr.f32.gmra.mrb[0].mxu0 %v146
    %v229 = vpop.f32.mrb[0].mxu0
    %v230 = vadd.f32 %v139, %v229
    %v231 = vpop.f32.mrb[0].mxu0
    %232 = vmatprep.mubr.f32.mxu0 0.0
    %233 = vmatmul.mubr.f32.gmra.mrb[0].mxu0 %v149
    %v234 = vpop.f32.mrb[0].mxu0
    %v235 = vadd.f32 %v139, %v234
    %v236 = vpop.f32.mrb[0].mxu0
    %237 = vmatprep.mubr.f32.mxu0 0.0
    %238 = vmatmul.mubr.f32.gmra.mrb[0].mxu0 %v152
    %v239 = vpop.f32.mrb[0].mxu0
    %v240 = vadd.f32 %v139, %v239
    %v241 = vpop.f32.mrb[0].mxu0
    %242 = vdwg.mxu0
    %v243 = vmax.f32 %v225, 0.0
    %v244 = vmax.f32 %v230, 0.0
    %v245 = vmax.f32 %v235, 0.0
    %v246 = vmax.f32 %v240, 0.0
    %v251 = vcombine.high %v243, %v243
    %v253 = vunpack.c.l.s4 1983009808
    %v254 = vunpack.c.0.s8 %v253
    %v255 = vlaneseq
    %v256 = vshrl.u32 %v255, 7
    %v257 = vsub.s32 %v254, %v256
    %v258 = vrot.slane %v243, %v257
    %v260 = vunpack.c.l.s4 1983009808
    %v261 = vunpack.c.0.s8 %v260
    %v262 = vlaneseq
    %v263 = vshrl.u32 %v262, 7
    %v264 = vsub.s32 %v261, %v263
    %v265 = vrot.slane %v251, %v264
    %v266 = vcombine.high %v258, %v258
    %v267 = vcombine.high %v265, %v265
    %v268 = vcombine.high %v244, %v244
    %v270 = vunpack.c.l.s4 1983009808
    %v271 = vunpack.c.0.s8 %v270
    %v272 = vlaneseq
    %v273 = vshrl.u32 %v272, 7
    %v274 = vsub.s32 %v271, %v273
    %v275 = vrot.slane %v244, %v274
    %v277 = vunpack.c.l.s4 1983009808
    %v278 = vunpack.c.0.s8 %v277
    %v279 = vlaneseq
    %v280 = vshrl.u32 %v279, 7
    %v281 = vsub.s32 %v278, %v280
    %v282 = vrot.slane %v268, %v281
    %v283 = vcombine.high %v275, %v275
    %v284 = vcombine.high %v282, %v282
    %v285 = vcombine.high %v245, %v245
    %v287 = vunpack.c.l.s4 1983009808
    %v288 = vunpack.c.0.s8 %v287
    %v289 = vlaneseq
    %v290 = vshrl.u32 %v289, 7
    %v291 = vsub.s32 %v288, %v290
    %v292 = vrot.slane %v245, %v291
    %v294 = vunpack.c.l.s4 1983009808
    %v295 = vunpack.c.0.s8 %v294
    %v296 = vlaneseq
    %v297 = vshrl.u32 %v296, 7
    %v298 = vsub.s32 %v295, %v297
    %v299 = vrot.slane %v285, %v298
    %v300 = vcombine.high %v292, %v292
    %v301 = vcombine.high %v299, %v299
    %v302 = vcombine.high %v246, %v246
    %v304 = vunpack.c.l.s4 1983009808
    %v305 = vunpack.c.0.s8 %v304
    %v306 = vlaneseq
    %v307 = vshrl.u32 %v306, 7
    %v308 = vsub.s32 %v305, %v307
    %v309 = vrot.slane %v246, %v308
    %v311 = vunpack.c.l.s4 1983009808
    %v312 = vunpack.c.0.s8 %v311
    %v313 = vlaneseq
    %v314 = vshrl.u32 %v313, 7
    %v315 = vsub.s32 %v312, %v314
    %v316 = vrot.slane %v302, %v315
    %v317 = vcombine.high %v309, %v309
    %v318 = vcombine.high %v316, %v316
    %v335 = vrot.slane %v258, 7
    %v336 = vrot.slane %v335, 2
    %v337 = vrot.slane %v266, 7
    %v338 = vrot.slane %v337, 2
    %v339 = vrot.slane %v265, 7
    %v340 = vrot.slane %v339, 2
    %v341 = vrot.slane %v267, 7
    %v342 = vrot.slane %v341, 2
    %v343 = vrot.slane %v275, 7
    %v344 = vrot.slane %v343, 2
    %v345 = vrot.slane %v283, 7
    %v346 = vrot.slane %v345, 2
    %v347 = vrot.slane %v282, 7
    %v348 = vrot.slane %v347, 2
    %v349 = vrot.slane %v284, 7
    %v350 = vrot.slane %v349, 2
    %v351 = vrot.slane %v292, 7
    %v352 = vrot.slane %v351, 2
    %v353 = vrot.slane %v300, 7
    %v354 = vrot.slane %v353, 2
    %v355 = vrot.slane %v299, 7
    %v356 = vrot.slane %v355, 2
    %v357 = vrot.slane %v301, 7
    %v358 = vrot.slane %v357, 2
    %v359 = vrot.slane %v309, 7
    %v360 = vrot.slane %v359, 2
    %v361 = vrot.slane %v317, 7
    %v362 = vrot.slane %v361, 2
    %v363 = vrot.slane %v316, 7
    %v364 = vrot.slane %v363, 2
    %v365 = vrot.slane %v318, 7
    %v366 = vrot.slane %v365, 2
    %v383 = vmax.f32 %v258, %v336
    %v384 = vmax.f32 %v266, %v338
    %v385 = vmax.f32 %v265, %v340
    %v386 = vmax.f32 %v267, %v342
    %v387 = vmax.f32 %v275, %v344
    %v388 = vmax.f32 %v283, %v346
    %v389 = vmax.f32 %v282, %v348
    %v390 = vmax.f32 %v284, %v350
    %v391 = vmax.f32 %v292, %v352
    %v392 = vmax.f32 %v300, %v354
    %v393 = vmax.f32 %v299, %v356
    %v394 = vmax.f32 %v301, %v358
    %v395 = vmax.f32 %v309, %v360
    %v396 = vmax.f32 %v317, %v362
    %v397 = vmax.f32 %v316, %v364
    %v398 = vmax.f32 %v318, %v366
    %v399 = vand.u32 %v32, 7
    %v400 = vand.u32 %v33, 7
    %vm401 = vcmp.eq.s32.totalorder %v399, 0
    %vm402 = vcmp.eq.s32.totalorder %v400, 0
    %v419 = vlaneseq
    %v420 = vshrl.u32 %v419, 7
    %v421 = vsub.s32 0, %v420
    %v422 = vrot.slane %v383, %v421
    %v423 = vlaneseq
    %v424 = vshrl.u32 %v423, 7
    %v425 = vsub.s32 0, %v424
    %v426 = vrot.slane %v384, %v425
    %v427 = vlaneseq
    %v428 = vshrl.u32 %v427, 7
    %v429 = vsub.s32 0, %v428
    %v430 = vrot.slane %v385, %v429
    %v431 = vlaneseq
    %v432 = vshrl.u32 %v431, 7
    %v433 = vsub.s32 0, %v432
    %v434 = vrot.slane %v386, %v433
    %v435 = vlaneseq
    %v436 = vshrl.u32 %v435, 7
    %v437 = vsub.s32 0, %v436
    %v438 = vrot.slane %v387, %v437
    %v439 = vlaneseq
    %v440 = vshrl.u32 %v439, 7
    %v441 = vsub.s32 0, %v440
    %v442 = vrot.slane %v388, %v441
    %v443 = vlaneseq
    %v444 = vshrl.u32 %v443, 7
    %v445 = vsub.s32 0, %v444
    %v446 = vrot.slane %v389, %v445
    %v447 = vlaneseq
    %v448 = vshrl.u32 %v447, 7
    %v449 = vsub.s32 0, %v448
    %v450 = vrot.slane %v390, %v449
    %v451 = vlaneseq
    %v452 = vshrl.u32 %v451, 7
    %v453 = vsub.s32 0, %v452
    %v454 = vrot.slane %v391, %v453
    %v455 = vlaneseq
    %v456 = vshrl.u32 %v455, 7
    %v457 = vsub.s32 0, %v456
    %v458 = vrot.slane %v392, %v457
    %v459 = vlaneseq
    %v460 = vshrl.u32 %v459, 7
    %v461 = vsub.s32 0, %v460
    %v462 = vrot.slane %v393, %v461
    %v463 = vlaneseq
    %v464 = vshrl.u32 %v463, 7
    %v465 = vsub.s32 0, %v464
    %v466 = vrot.slane %v394, %v465
    %v467 = vlaneseq
    %v468 = vshrl.u32 %v467, 7
    %v469 = vsub.s32 0, %v468
    %v470 = vrot.slane %v395, %v469
    %v471 = vlaneseq
    %v472 = vshrl.u32 %v471, 7
    %v473 = vsub.s32 0, %v472
    %v474 = vrot.slane %v396, %v473
    %v475 = vlaneseq
    %v476 = vshrl.u32 %v475, 7
    %v477 = vsub.s32 0, %v476
    %v478 = vrot.slane %v397, %v477
    %v479 = vlaneseq
    %v480 = vshrl.u32 %v479, 7
    %v481 = vsub.s32 0, %v480
    %v482 = vrot.slane %v398, %v481
    %vm483 = vcmask 1041409
    %v484 = vsel %vm483, %v426, %v422
    %vm485 = vcmask 1042434
    %v486 = vsel %vm485, %v430, %v484
    %vm487 = vcmask 1043459
    %v488 = vsel %vm487, %v434, %v486
    %vm489 = vcmask 1044484
    %v490 = vsel %vm489, %v438, %v488
    %vm491 = vcmask 1045509
    %v492 = vsel %vm491, %v442, %v490
    %vm493 = vcmask 1046534
    %v494 = vsel %vm493, %v446, %v492
    %vm495 = vcmask 1047559
    %v496 = vsel %vm495, %v450, %v494
    %v497 = vsel %vm483, %v458, %v454
    %v498 = vsel %vm485, %v462, %v497
    %v499 = vsel %vm487, %v466, %v498
    %v500 = vsel %vm489, %v470, %v499
    %v501 = vsel %vm491, %v474, %v500
    %v502 = vsel %vm493, %v478, %v501
    %v503 = vsel %vm495, %v482, %v502
    %v506 = vrot.slane %v496, 7
    %v507 = vrot.slane %v503, 7
    %v508 = vsel %vm48, %v506, %v507
    %v509 = vsel %vm48, %v507, %v506
    %v510 = vsel %vm401, 1, 0
    %v511 = vsel %vm402, 1, 0
    %vm512 = vcmp.eq.s32.totalorder %v510, 1
    %vm513 = vcmp.eq.s32.totalorder %v511, 1
    %v514 = vsel %vm512, 0.0, %v509
    %v515 = vsel %vm513, 0.0, %v508
    %vm516 = vcmp.eq.s32.totalorder %v399, 7
    %vm517 = vcmp.eq.s32.totalorder %v400, 7
    %v518 = vrot.slane %v496, 1
    %v519 = vrot.slane %v503, 1
    %v520 = vsel %vm73, %v518, %v519
    %v521 = vsel %vm73, %v519, %v518
    %v522 = vsel %vm516, 1, 0
    %v523 = vsel %vm517, 1, 0
    %vm524 = vcmp.eq.s32.totalorder %v522, 1
    %vm525 = vcmp.eq.s32.totalorder %v523, 1
    %v526 = vsel %vm524, 0.0, %v520
    %v527 = vsel %vm525, 0.0, %v521
    %528 = vrot.lane.b32.xlu0 %v496, 8
    %v529 = vpop.permute.xlu0 %528
    %530 = vrot.lane.b32.xlu0 %v503, 8
    %v531 = vpop.permute.xlu0 %530
    %536 = vrot.lane.b32.xlu0 %v526, 16
    %v537 = vpop.permute.xlu0 %536
    %538 = vrot.lane.b32.xlu0 %v527, 16
    %v539 = vpop.permute.xlu0 %538
    %v542 = vsel %vm127, %v514, %v529
    %v543 = vsel %vm127, %v515, %v531
    %vm544 = vcmask 130048
    %v545 = vsel %vm544, %v542, %v537
    %v546 = vsel %vm544, %v543, %v539
    %v547 = vld [vmem:[%s3] sm:$0xff]
    %v548 = vld [vmem:[%s3 + $0x8] sm:$0xff]
    %v549 = vld [vmem:[%s3 + $0x10] sm:$0xff]
    %v550 = vld [vmem:[%s4] sm:$0x1]
    %v552 = vlaneseq
    %v553 = vshrl.u32 %v552, 7
    %v554 = vsub.s32 0, %v553
    %v555 = vrot.slane %v550, %v554
    %vm557 = vcmask 195584
    %v559 = vsel %vm557, %v545, 0
    %v562 = vsel %vm557, %v546, 0
    %564 = vmatprep.subr.mxu0 0.0
    %565 = vmatpush1.msra.mxu0 %v547
    %566 = vmatprep.subr.mxu0 0.0
    %567 = vmatpush1.msra.mxu0 %v548
    %568 = vmatprep.subr.mxu0 0.0
    %569 = vmatpush1.msra.mxu0 %v549
    %570 = vmatprep.subr.mxu0 0.0
    %571 = vmatpush1.msra.mxu0 0.0
    %572 = vmatprep.subr.mxu0 0.0
    %573 = vmatpush1.msra.mxu0 0.0
    %574 = vmatprep.subr.mxu0 0.0
    %575 = vmatpush1.msra.mxu0 0.0
    %576 = vmatprep.subr.mxu0 0.0
    %577 = vmatpush1.msra.mxu0 0.0
    %578 = vmatprep.subr.mxu0 0.0
    %579 = vmatpush1.msra.mxu0 0.0
    %580 = vmatprep.subr.mxu0 0.0
    %581 = vmatpush1.msra.mxu0 0.0
    %582 = vmatprep.subr.mxu0 0.0
    %583 = vmatpush1.msra.mxu0 0.0
    %584 = vmatprep.subr.mxu0 0.0
    %585 = vmatpush1.msra.mxu0 0.0
    %586 = vmatprep.subr.mxu0 0.0
    %587 = vmatpush1.msra.mxu0 0.0
    %588 = vmatprep.subr.mxu0 0.0
    %589 = vmatpush1.msra.mxu0 0.0
    %590 = vmatprep.subr.mxu0 0.0
    %591 = vmatpush1.msra.mxu0 0.0
    %592 = vmatprep.subr.mxu0 0.0
    %593 = vmatpush1.msra.mxu0 0.0
    %594 = vmatprep.subr.mxu0 0.0
    %595 = vmatpush1.msra.mxu0 0.0
    %596 = vmatprep.subr.mxu0 0.0
    %597 = vmatpush1.msra.mxu0 0.0
    %598 = vmatprep.subr.mxu0 0.0
    %599 = vmatpush1.msra.mxu0 0.0
    %600 = vmatprep.subr.mxu0 0.0
    %601 = vmatpush1.msra.mxu0 0.0
    %602 = vmatprep.subr.mxu0 0.0
    %603 = vmatpush1.msra.mxu0 0.0
    %604 = vmatprep.subr.mxu0 0.0
    %605 = vmatpush1.msra.mxu0 0.0
    %606 = vmatprep.subr.mxu0 0.0
    %607 = vmatpush1.msra.mxu0 0.0
    %608 = vmatprep.subr.mxu0 0.0
    %609 = vmatpush1.msra.mxu0 0.0
    %610 = vmatprep.subr.mxu0 0.0
    %611 = vmatpush1.msra.mxu0 0.0
    %612 = vmatprep.subr.mxu0 0.0
    %613 = vmatpush1.msra.mxu0 0.0
    %614 = vmatprep.subr.mxu0 0.0
    %615 = vmatpush1.msra.mxu0 0.0
    %616 = vmatprep.subr.mxu0 0.0
    %617 = vmatpush1.msra.mxu0 0.0
    %618 = vmatprep.subr.mxu0 0.0
    %619 = vmatpush1.msra.mxu0 0.0
    %620 = vmatprep.subr.mxu0 0.0
    %621 = vmatpush1.msra.mxu0 0.0
    %622 = vmatprep.subr.mxu0 0.0
    %623 = vmatpush1.msra.mxu0 0.0
    %624 = vmatprep.subr.mxu0 0.0
    %625 = vmatpush1.msra.mxu0 0.0
    %626 = vmatprep.subr.mxu0 0.0
    %627 = vmatpush1.msra.mxu0 0.0
    %628 = vmatprep.mubr.f32.mxu0 0.0
    %629 = vmatmul.mubr.f32.gmra.mrb[0].mxu0 %v559
    %v630 = vpop.f32.mrb[0].mxu0
    %v631 = vadd.f32 %v555, %v630
    %v632 = vpop.f32.mrb[0].mxu0
    %633 = vmatprep.mubr.f32.mxu0 0.0
    %634 = vmatmul.mubr.f32.gmra.mrb[0].mxu0 %v562
    %v635 = vpop.f32.mrb[0].mxu0
    %v636 = vadd.f32 %v555, %v635
    %v637 = vpop.f32.mrb[0].mxu0
    %638 = vdwg.mxu0
    %v639 = vmax.f32 %v631, 0.0
    %v640 = vmax.f32 %v636, 0.0
    %v643 = vcombine.high %v639, %v639
    %v645 = vunpack.c.l.s4 1983009808
    %v646 = vunpack.c.0.s8 %v645
    %v647 = vlaneseq
    %v648 = vshrl.u32 %v647, 7
    %v649 = vsub.s32 %v646, %v648
    %v650 = vrot.slane %v639, %v649
    %v652 = vunpack.c.l.s4 1983009808
    %v653 = vunpack.c.0.s8 %v652
    %v654 = vlaneseq
    %v655 = vshrl.u32 %v654, 7
    %v656 = vsub.s32 %v653, %v655
    %v657 = vrot.slane %v643, %v656
    %v658 = vcombine.high %v650, %v650
    %v659 = vcombine.high %v657, %v657
    %v660 = vcombine.high %v640, %v640
    %v662 = vunpack.c.l.s4 1983009808
    %v663 = vunpack.c.0.s8 %v662
    %v664 = vlaneseq
    %v665 = vshrl.u32 %v664, 7
    %v666 = vsub.s32 %v663, %v665
    %v667 = vrot.slane %v640, %v666
    %v669 = vunpack.c.l.s4 1983009808
    %v670 = vunpack.c.0.s8 %v669
    %v671 = vlaneseq
    %v672 = vshrl.u32 %v671, 7
    %v673 = vsub.s32 %v670, %v672
    %v674 = vrot.slane %v660, %v673
    %v675 = vcombine.high %v667, %v667
    %v676 = vcombine.high %v674, %v674
    %v685 = vrot.slane %v650, 7
    %v686 = vrot.slane %v685, 2
    %v687 = vrot.slane %v658, 7
    %v688 = vrot.slane %v687, 2
    %v689 = vrot.slane %v657, 7
    %v690 = vrot.slane %v689, 2
    %v691 = vrot.slane %v659, 7
    %v692 = vrot.slane %v691, 2
    %v693 = vrot.slane %v667, 7
    %v694 = vrot.slane %v693, 2
    %v695 = vrot.slane %v675, 7
    %v696 = vrot.slane %v695, 2
    %v697 = vrot.slane %v674, 7
    %v698 = vrot.slane %v697, 2
    %v699 = vrot.slane %v676, 7
    %v700 = vrot.slane %v699, 2
    %v709 = vmax.f32 %v650, %v686
    %v710 = vmax.f32 %v658, %v688
    %v711 = vmax.f32 %v657, %v690
    %v712 = vmax.f32 %v659, %v692
    %v713 = vmax.f32 %v667, %v694
    %v714 = vmax.f32 %v675, %v696
    %v715 = vmax.f32 %v674, %v698
    %v716 = vmax.f32 %v676, %v700
    %v717 = vld [vmem:[%s5] sm:$0xff]
    %v718 = vld [vmem:[%s5 + $0x8] sm:$0xff]
    %v719 = vld [vmem:[%s6] sm:$0x1]
    %v721 = vlaneseq
    %v722 = vshrl.u32 %v721, 7
    %v723 = vsub.s32 0, %v722
    %v724 = vrot.slane %v719, %v723
    %v734 = vlaneseq
    %v735 = vshrl.u32 %v734, 7
    %v736 = vsub.s32 0, %v735
    %v737 = vrot.slane %v709, %v736
    %v738 = vlaneseq
    %v739 = vshrl.u32 %v738, 7
    %v740 = vsub.s32 0, %v739
    %v741 = vrot.slane %v710, %v740
    %v742 = vlaneseq
    %v743 = vshrl.u32 %v742, 7
    %v744 = vsub.s32 0, %v743
    %v745 = vrot.slane %v711, %v744
    %v746 = vlaneseq
    %v747 = vshrl.u32 %v746, 7
    %v748 = vsub.s32 0, %v747
    %v749 = vrot.slane %v712, %v748
    %v750 = vlaneseq
    %v751 = vshrl.u32 %v750, 7
    %v752 = vsub.s32 0, %v751
    %v753 = vrot.slane %v713, %v752
    %v754 = vlaneseq
    %v755 = vshrl.u32 %v754, 7
    %v756 = vsub.s32 0, %v755
    %v757 = vrot.slane %v714, %v756
    %v758 = vlaneseq
    %v759 = vshrl.u32 %v758, 7
    %v760 = vsub.s32 0, %v759
    %v761 = vrot.slane %v715, %v760
    %v762 = vlaneseq
    %v763 = vshrl.u32 %v762, 7
    %v764 = vsub.s32 0, %v763
    %v765 = vrot.slane %v716, %v764
    %v766 = vsel %vm483, %v741, %v737
    %v767 = vsel %vm485, %v745, %v766
    %v768 = vsel %vm487, %v749, %v767
    %v769 = vsel %vm489, %v753, %v768
    %v770 = vsel %vm491, %v757, %v769
    %v771 = vsel %vm493, %v761, %v770
    %v772 = vsel %vm495, %v765, %v771
    %v773 = vsel %vm544, %v772, 0
    %775 = vmatprep.subr.mxu0 0.0
    %776 = vmatpush1.msra.mxu0 %v717
    %777 = vmatprep.subr.mxu0 0.0
    %778 = vmatpush1.msra.mxu0 %v718
    %779 = vmatprep.subr.mxu0 0.0
    %780 = vmatpush1.msra.mxu0 0.0
    %781 = vmatprep.subr.mxu0 0.0
    %782 = vmatpush1.msra.mxu0 0.0
    %783 = vmatprep.subr.mxu0 0.0
    %784 = vmatpush1.msra.mxu0 0.0
    %785 = vmatprep.subr.mxu0 0.0
    %786 = vmatpush1.msra.mxu0 0.0
    %787 = vmatprep.subr.mxu0 0.0
    %788 = vmatpush1.msra.mxu0 0.0
    %789 = vmatprep.subr.mxu0 0.0
    %790 = vmatpush1.msra.mxu0 0.0
    %791 = vmatprep.subr.mxu0 0.0
    %792 = vmatpush1.msra.mxu0 0.0
    %793 = vmatprep.subr.mxu0 0.0
    %794 = vmatpush1.msra.mxu0 0.0
    %795 = vmatprep.subr.mxu0 0.0
    %796 = vmatpush1.msra.mxu0 0.0
    %797 = vmatprep.subr.mxu0 0.0
    %798 = vmatpush1.msra.mxu0 0.0
    %799 = vmatprep.subr.mxu0 0.0
    %800 = vmatpush1.msra.mxu0 0.0
    %801 = vmatprep.subr.mxu0 0.0
    %802 = vmatpush1.msra.mxu0 0.0
    %803 = vmatprep.subr.mxu0 0.0
    %804 = vmatpush1.msra.mxu0 0.0
    %805 = vmatprep.subr.mxu0 0.0
    %806 = vmatpush1.msra.mxu0 0.0
    %807 = vmatprep.subr.mxu0 0.0
    %808 = vmatpush1.msra.mxu0 0.0
    %809 = vmatprep.subr.mxu0 0.0
    %810 = vmatpush1.msra.mxu0 0.0
    %811 = vmatprep.subr.mxu0 0.0
    %812 = vmatpush1.msra.mxu0 0.0
    %813 = vmatprep.subr.mxu0 0.0
    %814 = vmatpush1.msra.mxu0 0.0
    %815 = vmatprep.subr.mxu0 0.0
    %816 = vmatpush1.msra.mxu0 0.0
    %817 = vmatprep.subr.mxu0 0.0
    %818 = vmatpush1.msra.mxu0 0.0
    %819 = vmatprep.subr.mxu0 0.0
    %820 = vmatpush1.msra.mxu0 0.0
    %821 = vmatprep.subr.mxu0 0.0
    %822 = vmatpush1.msra.mxu0 0.0
    %823 = vmatprep.subr.mxu0 0.0
    %824 = vmatpush1.msra.mxu0 0.0
    %825 = vmatprep.subr.mxu0 0.0
    %826 = vmatpush1.msra.mxu0 0.0
    %827 = vmatprep.subr.mxu0 0.0
    %828 = vmatpush1.msra.mxu0 0.0
    %829 = vmatprep.subr.mxu0 0.0
    %830 = vmatpush1.msra.mxu0 0.0
    %831 = vmatprep.subr.mxu0 0.0
    %832 = vmatpush1.msra.mxu0 0.0
    %833 = vmatprep.subr.mxu0 0.0
    %834 = vmatpush1.msra.mxu0 0.0
    %835 = vmatprep.subr.mxu0 0.0
    %836 = vmatpush1.msra.mxu0 0.0
    %837 = vmatprep.subr.mxu0 0.0
    %838 = vmatpush1.msra.mxu0 0.0
    %839 = vmatprep.mubr.f32.mxu0 0.0
    %840 = vmatmul.mubr.f32.gmra.mrb[0].mxu0 %v773
    %v841 = vpop.f32.mrb[0].mxu0
    %v842 = vadd.f32 %v724, %v841
    %v843 = vpop.f32.mrb[0].mxu0
    %844 = vdwg.mxu0
    %845 = vst [vmem:[#allocation2] sm:$0xff] %v842
    // Predicated region
    $region30: #{tpu_custom_call.1} parent=1 // pred_check
      _
    $region31: #{tpu_custom_call.1} parent=1 // pred_check_branch
      %847 = sbr.rel (0) target = $region33
    $region32: #{tpu_custom_call.1} parent=1 // pred_region
      %s849 = ssub.s32 128, 128
      %850 = vsyncadd [#allocation3], %s849
      %s852 = sshll.u32 [#allocation2], 4
      %s853 = int_to_ptr.vmem [resolvable:$true] %s852
      %855 = dma.vmem_to_hbm [thread:$0]  %s853, 128, %s7, [#allocation3]
    $region33: #{tpu_custom_call.1} parent=1 // pred_fallthru
      _
    // Predicated region
    $region34: #{tpu_custom_call.1} parent=1 // pred_check
      _
    $region35: #{tpu_custom_call.1} parent=1 // pred_check_branch
      %857 = sbr.rel (0) target = $region37
    $region36: #{tpu_custom_call.1} parent=1 // pred_region
      %858 = dma.done [#allocation3], 128
    $region37: #{tpu_custom_call.1} parent=1 // pred_fallthru
      _
    %859 = vsyncpa [#allocation3], 1

</llo_original>
